<compile_context>
chip_gen: v7x
topology: tpu7x:2x2x1
jax: 0.10.0
libtpu: 0.0.40
codegen_flags: <defaults>
</compile_context>

<pallas_src>
import jax
import jax.numpy as jnp
from jax.experimental import pallas as pl
from jax.experimental.pallas import tpu as pltpu


LN_EPS = 1e-5  # torch.nn.LayerNorm default


def _layernorm_f32(h):
    """LayerNorm(elementwise_affine=False), two-pass moments in f32."""
    inv_d = jnp.float32(1.0 / h.shape[-1])           # compile-time constant
    mu = jnp.sum(h, axis=-1, keepdims=True) * inv_d
    d = h - mu                                        # reused for normalization
    var = jnp.sum(d * d, axis=-1, keepdims=True) * inv_d
    return d * jax.lax.rsqrt(var + LN_EPS)


def vae_encoder_kernel(x_ref,
                       w0_ref, b0_ref,
                       w1_ref, b1_ref,
                       wh_ref, bh_ref,
                       out_ref):
    # x tile in its native dtype goes straight to the MXU; accumulate in f32.
    x = x_ref[...]

    # --- encode layer 0: Linear -> LayerNorm -> ReLU (32 -> 64) ---
    h = jnp.dot(x, w0_ref[...], preferred_element_type=jnp.float32) + b0_ref[...]
    h = jnp.maximum(_layernorm_f32(h), 0.0)

    # --- encode layer 1: Linear -> LayerNorm -> ReLU (64 -> 32) ---
    h = jnp.dot(h, w1_ref[...], preferred_element_type=jnp.float32) + b1_ref[...]
    h = jnp.maximum(_layernorm_f32(h), 0.0)

    # --- fused heads: [mean | log_var] in one matmul, one lane-denser store ---
    out = jnp.dot(h, wh_ref[...], preferred_element_type=jnp.float32) + bh_ref[...]
    out_ref[...] = out.astype(out_ref.dtype)


def _round_up(n, m):
    return ((n + m - 1) // m) * m


def _choose_batch_tile(B, max_tile_b):
    """Pick (tile_b, n_tiles).

    Goals (per perf review): >= ~1 MiB DMA blocks to amortize the ~0.35 us/step
    grid overhead, but >= 4 grid steps once B is large enough so DMA in/out and
    compute pipeline (and v7x's 2 TensorCores both get work on the 'parallel'
    batch axis).  tile_b stays a multiple of 8 (sublane alignment); the last
    tile may run past B — Pallas masks the boundary block.
    """
    max_tile_b = max(8, _round_up(max_tile_b, 8))
    if B <= 2048:
        tile_b = min(_round_up(B, 8), max_tile_b)
        return tile_b, -(-B // tile_b)
    target_steps = max(4, -(-B // max_tile_b))
    tile_b = _round_up(-(-B // target_steps), 8)
    tile_b = max(1024, min(tile_b, max_tile_b))
    return tile_b, -(-B // tile_b)


def prepare_vae_encoder_params(w0, b0, w1, b1, wm, bm, wl, bl):
    """One-time parameter prep (hoisted out of the per-call forward).

    Weights must already be in (in, out) layout — transpose PyTorch's
    (out, in) nn.Linear weights before calling.  Fuses the mean / log_var
    heads into one (D_h2, 2*latent) weight and one (1, 2*latent) bias.
    """
    wh = jnp.concatenate([wm, wl], axis=1)
    bh = jnp.concatenate([bm, bl], axis=1)
    return (w0, b0.reshape(1, -1), w1, b1.reshape(1, -1), wh, bh)


def vae_encoder_forward(x, prepared_params, *, max_tile_b=8192,
                        out_dtype=None, split_outputs=True):
    """x: [B, D_in].  Returns (mean, log_var) each [B, latent_dim], or the fused
    [B, 2*latent_dim] slab if split_outputs=False (lets consumers slice lazily).
    out_dtype defaults to x.dtype; pass jnp.bfloat16 to halve output HBM traffic
    if downstream tolerates it."""
    B, D_in = x.shape
    w0, b0, w1, b1, wh, bh = prepared_params
    D_h1 = w0.shape[1]
    D_h2 = w1.shape[1]
    D_out = wh.shape[1]
    D_lat = D_out // 2
    out_dtype = x.dtype if out_dtype is None else out_dtype

    tile_b, n_tiles = _choose_batch_tile(B, max_tile_b)

    def batch_map(i):
        return (i, 0)

    def const_map(i):
        return (0, 0)

    out = pl.pallas_call(
        vae_encoder_kernel,
        out_shape=jax.ShapeDtypeStruct((B, D_out), out_dtype),
        grid_spec=pltpu.PrefetchScalarGridSpec(
            num_scalar_prefetch=0,
            grid=(n_tiles,),
            in_specs=[
                pl.BlockSpec((tile_b, D_in), batch_map),   # x tile (native dtype)
                pl.BlockSpec((D_in, D_h1), const_map),     # W0 (in, out)
                pl.BlockSpec((1, D_h1), const_map),        # b0
                pl.BlockSpec((D_h1, D_h2), const_map),     # W1
                pl.BlockSpec((1, D_h2), const_map),        # b1
                pl.BlockSpec((D_h2, D_out), const_map),    # [Wm | Wl]
                pl.BlockSpec((1, D_out), const_map),       # [bm | bl]
            ],
            out_specs=pl.BlockSpec((tile_b, D_out), batch_map),  # [mean | log_var]
        ),
        compiler_params=pltpu.CompilerParams(
            dimension_semantics=("parallel",),
            vmem_limit_bytes=32 * 1024 * 1024),
    )(x, w0, b0, w1, b1, wh, bh)

    if not split_outputs:
        return out
    return out[:, :D_lat], out[:, D_lat:]


def _init_linear(key, fan_in, fan_out):
    """PyTorch nn.Linear default init: U(-1/sqrt(fan_in), 1/sqrt(fan_in)).
    Returns W already transposed to (in, out) plus bias (1, out)."""
    kw, kb = jax.random.split(key)
    bound = 1.0 / jnp.sqrt(fan_in)
    w = jax.random.uniform(kw, (fan_in, fan_out), jnp.float32, -bound, bound)
    b = jax.random.uniform(kb, (1, fan_out), jnp.float32, -bound, bound)
    return w, b


def _reference_forward(x, params):
    w0, b0, w1, b1, wm, bm, wl, bl = params

    def ln(h):
        mu = jnp.mean(h, axis=-1, keepdims=True)
        var = jnp.mean((h - mu) ** 2, axis=-1, keepdims=True)
        return (h - mu) * jax.lax.rsqrt(var + LN_EPS)

    h = jnp.maximum(ln(x @ w0 + b0), 0.0)
    h = jnp.maximum(ln(h @ w1 + b1), 0.0)
    return h @ wm + bm, h @ wl + bl


if __name__ == "__main__":
    # Config consistent with the module: layer_dims=[32, 64, 32], latent_dim=16.
    layer_dims = [32, 64, 32]
    latent_dim = 16
    batch = 64

    key = jax.random.PRNGKey(0)
    kx, k0, k1, km, kl = jax.random.split(key, 5)

    x = jax.random.normal(kx, (batch, layer_dims[0]), jnp.float32)

    w0, b0 = _init_linear(k0, layer_dims[0], layer_dims[1])   # CondLayer.layer (n_conditions=0)
    w1, b1 = _init_linear(k1, layer_dims[1], layer_dims[2])   # nn.Linear
    wm, bm = _init_linear(km, layer_dims[2], latent_dim)      # mean_encoder
    wl, bl = _init_linear(kl, layer_dims[2], latent_dim)      # logvar_encoder
    params = (w0, b0, w1, b1, wm, bm, wl, bl)

    # Head fusion / weight prep is done ONCE, outside the forward call.
    prepared = prepare_vae_encoder_params(*params)

    mean, log_var = vae_encoder_forward(x, prepared)
    jax.block_until_ready((mean, log_var))

    # Full-f32 path now matches the f32 PyTorch module (no bf16 quantization).
    ref_mean, ref_logvar = _reference_forward(x, params)

    assert mean.shape == (batch, latent_dim) and log_var.shape == (batch, latent_dim)
    assert jnp.allclose(mean, ref_mean, rtol=1e-4, atol=1e-4)
    assert jnp.allclose(log_var, ref_logvar, rtol=1e-4, atol=1e-4)

    print("KERNEL_OK")
</pallas_src>

<mosaic_0001>
module attributes {stable_mosaic.version = 11 : i64} {
  func.func @vae_encoder_kernel(%arg0: i32, %arg1: memref<64x32xf32, #tpu.memory_space<vmem>>, %arg2: memref<32x64xf32, #tpu.memory_space<vmem>>, %arg3: memref<1x64xf32, #tpu.memory_space<vmem>>, %arg4: memref<64x32xf32, #tpu.memory_space<vmem>>, %arg5: memref<1x32xf32, #tpu.memory_space<vmem>>, %arg6: memref<32x32xf32, #tpu.memory_space<vmem>>, %arg7: memref<1x32xf32, #tpu.memory_space<vmem>>, %arg8: memref<64x32xf32, #tpu.memory_space<vmem>>) attributes {dimension_semantics = [#tpu.dimension_semantics<parallel>], iteration_bounds = array<i64: 1>, scalar_prefetch = 0 : i64, scratch_operands = 0 : i64, tpu.core_type = #tpu.core_type<tc>, window_params = [{transform_indices = @transform_0, window_bounds = array<i64: 64, 32>}, {pipeline_mode = #tpu.pipeline_mode<synchronous>, transform_indices = @transform_1, window_bounds = array<i64: 32, 64>}, {pipeline_mode = #tpu.pipeline_mode<synchronous>, transform_indices = @transform_2, window_bounds = array<i64: 1, 64>}, {pipeline_mode = #tpu.pipeline_mode<synchronous>, transform_indices = @transform_3, window_bounds = array<i64: 64, 32>}, {pipeline_mode = #tpu.pipeline_mode<synchronous>, transform_indices = @transform_4, window_bounds = array<i64: 1, 32>}, {pipeline_mode = #tpu.pipeline_mode<synchronous>, transform_indices = @transform_5, window_bounds = array<i64: 32, 32>}, {pipeline_mode = #tpu.pipeline_mode<synchronous>, transform_indices = @transform_6, window_bounds = array<i64: 1, 32>}, {transform_indices = @transform_7, window_bounds = array<i64: 64, 32>}]} {
    %c0 = arith.constant 0 : index
    %c0_0 = arith.constant 0 : index
    %0 = vector.load %arg1[%c0, %c0_0] : memref<64x32xf32, #tpu.memory_space<vmem>>, vector<64x32xf32>
    %c0_1 = arith.constant 0 : index
    %c0_2 = arith.constant 0 : index
    %1 = vector.load %arg2[%c0_1, %c0_2] : memref<32x64xf32, #tpu.memory_space<vmem>>, vector<32x64xf32>
    %cst = arith.constant dense<0.000000e+00> : vector<64x64xf32>
    %2 = tpu.matmul %0, %1, %cst {dimension_numbers = #tpu.dot_dimension_numbers<[1], [0], [0], [1], [0, 0, 1, 1], [], []>} : vector<64x32xf32>, vector<32x64xf32>, vector<64x64xf32> -> vector<64x64xf32>
    %c0_3 = arith.constant 0 : index
    %c0_4 = arith.constant 0 : index
    %3 = vector.load %arg3[%c0_3, %c0_4] : memref<1x64xf32, #tpu.memory_space<vmem>>, vector<1x64xf32>
    %4 = vector.broadcast %3 : vector<1x64xf32> to vector<64x64xf32>
    %5 = arith.addf %2, %4 : vector<64x64xf32>
    %cst_5 = arith.constant dense<0.000000e+00> : vector<64xf32>
    %6 = vector.multi_reduction <add>, %5, %cst_5 [1] : vector<64x64xf32> to vector<64xf32>
    %7 = vector.shape_cast %6 : vector<64xf32> to vector<64x1xf32>
    %cst_6 = arith.constant 1.562500e-02 : f32
    %8 = vector.broadcast %cst_6 : f32 to vector<64x1xf32>
    %9 = arith.mulf %7, %8 : vector<64x1xf32>
    %10 = vector.broadcast %9 : vector<64x1xf32> to vector<64x64xf32>
    %11 = arith.subf %5, %10 : vector<64x64xf32>
    %12 = arith.mulf %11, %11 : vector<64x64xf32>
    %cst_7 = arith.constant dense<0.000000e+00> : vector<64xf32>
    %13 = vector.multi_reduction <add>, %12, %cst_7 [1] : vector<64x64xf32> to vector<64xf32>
    %14 = vector.shape_cast %13 : vector<64xf32> to vector<64x1xf32>
    %cst_8 = arith.constant 1.562500e-02 : f32
    %15 = vector.broadcast %cst_8 : f32 to vector<64x1xf32>
    %16 = arith.mulf %14, %15 : vector<64x1xf32>
    %cst_9 = arith.constant 9.99999974E-6 : f32
    %17 = vector.broadcast %cst_9 : f32 to vector<64x1xf32>
    %18 = arith.addf %16, %17 : vector<64x1xf32>
    %19 = math.rsqrt %18 : vector<64x1xf32>
    %20 = vector.broadcast %19 : vector<64x1xf32> to vector<64x64xf32>
    %21 = arith.mulf %11, %20 : vector<64x64xf32>
    %cst_10 = arith.constant 0.000000e+00 : f32
    %22 = vector.broadcast %cst_10 : f32 to vector<64x64xf32>
    %23 = arith.maximumf %21, %22 : vector<64x64xf32>
    %c0_11 = arith.constant 0 : index
    %c0_12 = arith.constant 0 : index
    %24 = vector.load %arg4[%c0_11, %c0_12] : memref<64x32xf32, #tpu.memory_space<vmem>>, vector<64x32xf32>
    %cst_13 = arith.constant dense<0.000000e+00> : vector<64x32xf32>
    %25 = tpu.matmul %23, %24, %cst_13 {dimension_numbers = #tpu.dot_dimension_numbers<[1], [0], [0], [1], [0, 0, 1, 1], [], []>} : vector<64x64xf32>, vector<64x32xf32>, vector<64x32xf32> -> vector<64x32xf32>
    %c0_14 = arith.constant 0 : index
    %c0_15 = arith.constant 0 : index
    %26 = vector.load %arg5[%c0_14, %c0_15] : memref<1x32xf32, #tpu.memory_space<vmem>>, vector<1x32xf32>
    %27 = vector.broadcast %26 : vector<1x32xf32> to vector<64x32xf32>
    %28 = arith.addf %25, %27 : vector<64x32xf32>
    %cst_16 = arith.constant dense<0.000000e+00> : vector<64xf32>
    %29 = vector.multi_reduction <add>, %28, %cst_16 [1] : vector<64x32xf32> to vector<64xf32>
    %30 = vector.shape_cast %29 : vector<64xf32> to vector<64x1xf32>
    %cst_17 = arith.constant 3.125000e-02 : f32
    %31 = vector.broadcast %cst_17 : f32 to vector<64x1xf32>
    %32 = arith.mulf %30, %31 : vector<64x1xf32>
    %33 = vector.broadcast %32 : vector<64x1xf32> to vector<64x32xf32>
    %34 = arith.subf %28, %33 : vector<64x32xf32>
    %35 = arith.mulf %34, %34 : vector<64x32xf32>
    %cst_18 = arith.constant dense<0.000000e+00> : vector<64xf32>
    %36 = vector.multi_reduction <add>, %35, %cst_18 [1] : vector<64x32xf32> to vector<64xf32>
    %37 = vector.shape_cast %36 : vector<64xf32> to vector<64x1xf32>
    %cst_19 = arith.constant 3.125000e-02 : f32
    %38 = vector.broadcast %cst_19 : f32 to vector<64x1xf32>
    %39 = arith.mulf %37, %38 : vector<64x1xf32>
    %cst_20 = arith.constant 9.99999974E-6 : f32
    %40 = vector.broadcast %cst_20 : f32 to vector<64x1xf32>
    %41 = arith.addf %39, %40 : vector<64x1xf32>
    %42 = math.rsqrt %41 : vector<64x1xf32>
    %43 = vector.broadcast %42 : vector<64x1xf32> to vector<64x32xf32>
    %44 = arith.mulf %34, %43 : vector<64x32xf32>
    %cst_21 = arith.constant 0.000000e+00 : f32
    %45 = vector.broadcast %cst_21 : f32 to vector<64x32xf32>
    %46 = arith.maximumf %44, %45 : vector<64x32xf32>
    %c0_22 = arith.constant 0 : index
    %c0_23 = arith.constant 0 : index
    %47 = vector.load %arg6[%c0_22, %c0_23] : memref<32x32xf32, #tpu.memory_space<vmem>>, vector<32x32xf32>
    %cst_24 = arith.constant dense<0.000000e+00> : vector<64x32xf32>
    %48 = tpu.matmul %46, %47, %cst_24 {dimension_numbers = #tpu.dot_dimension_numbers<[1], [0], [0], [1], [0, 0, 1, 1], [], []>} : vector<64x32xf32>, vector<32x32xf32>, vector<64x32xf32> -> vector<64x32xf32>
    %c0_25 = arith.constant 0 : index
    %c0_26 = arith.constant 0 : index
    %49 = vector.load %arg7[%c0_25, %c0_26] : memref<1x32xf32, #tpu.memory_space<vmem>>, vector<1x32xf32>
    %50 = vector.broadcast %49 : vector<1x32xf32> to vector<64x32xf32>
    %51 = arith.addf %48, %50 : vector<64x32xf32>
    %c0_27 = arith.constant 0 : index
    %c0_28 = arith.constant 0 : index
    %52 = vector.load %arg8[%c0_27, %c0_28] : memref<64x32xf32, #tpu.memory_space<vmem>>, vector<64x32xf32>
    tpu.vector_store %arg8[%c0_27, %c0_28], %51 {strides = array<i32>} : memref<64x32xf32, #tpu.memory_space<vmem>>, vector<64x32xf32>,
    return
  }
  func.func @transform_0(%arg0: i32) -> (i32, i32) {
    %c0_i32 = arith.constant 0 : i32
    %c0_i32_0 = arith.constant 0 : i32
    return %arg0, %c0_i32 : i32, i32
  }
  func.func @transform_1(%arg0: i32) -> (i32, i32) {
    %c0_i32 = arith.constant 0 : i32
    %c0_i32_0 = arith.constant 0 : i32
    %c0_i32_1 = arith.constant 0 : i32
    return %c0_i32, %c0_i32_0 : i32, i32
  }
  func.func @transform_2(%arg0: i32) -> (i32, i32) {
    %c0_i32 = arith.constant 0 : i32
    %c0_i32_0 = arith.constant 0 : i32
    %c0_i32_1 = arith.constant 0 : i32
    return %c0_i32, %c0_i32_0 : i32, i32
  }
  func.func @transform_3(%arg0: i32) -> (i32, i32) {
    %c0_i32 = arith.constant 0 : i32
    %c0_i32_0 = arith.constant 0 : i32
    %c0_i32_1 = arith.constant 0 : i32
    return %c0_i32, %c0_i32_0 : i32, i32
  }
  func.func @transform_4(%arg0: i32) -> (i32, i32) {
    %c0_i32 = arith.constant 0 : i32
    %c0_i32_0 = arith.constant 0 : i32
    %c0_i32_1 = arith.constant 0 : i32
    return %c0_i32, %c0_i32_0 : i32, i32
  }
  func.func @transform_5(%arg0: i32) -> (i32, i32) {
    %c0_i32 = arith.constant 0 : i32
    %c0_i32_0 = arith.constant 0 : i32
    %c0_i32_1 = arith.constant 0 : i32
    return %c0_i32, %c0_i32_0 : i32, i32
  }
  func.func @transform_6(%arg0: i32) -> (i32, i32) {
    %c0_i32 = arith.constant 0 : i32
    %c0_i32_0 = arith.constant 0 : i32
    %c0_i32_1 = arith.constant 0 : i32
    return %c0_i32, %c0_i32_0 : i32, i32
  }
  func.func @transform_7(%arg0: i32) -> (i32, i32) {
    %c0_i32 = arith.constant 0 : i32
    %c0_i32_0 = arith.constant 0 : i32
    return %arg0, %c0_i32 : i32, i32
  }
}

</mosaic_0001>

<llo_original>
// kernel: tpu_custom_call.1
$region0: #{tpu_custom_call.1}
  #allocation0 [shape = 'u32[]', space=smem, size = 0x4, offset = 0x4, fixed_abs, tag = 'smem constant byte address 0x4 - core index']
  #allocation1 [shape = 'u32[144,128]{1,0:T(1,128)}', space=vmem, size = 0x12000, scoped, tag = 'internal scratch']
  %s0 = inlined_call_operand.vmem [shape: f32[64,32], index: 0, kind: input, shape index: {}]
  %s1 = inlined_call_operand.vmem [shape: f32[32,64], index: 1, kind: input, shape index: {}]
  %s2 = inlined_call_operand.vmem [shape: f32[1,64], index: 2, kind: input, shape index: {}]
  %s3 = inlined_call_operand.vmem [shape: f32[64,32], index: 3, kind: input, shape index: {}]
  %s4 = inlined_call_operand.vmem [shape: f32[1,32], index: 4, kind: input, shape index: {}]
  %s5 = inlined_call_operand.vmem [shape: f32[32,32], index: 5, kind: input, shape index: {}]
  %s6 = inlined_call_operand.vmem [shape: f32[1,32], index: 6, kind: input, shape index: {}]
  %s7 = inlined_call_operand.vmem [shape: f32[64,32], index: 7, kind: output, shape index: {}]
  %s8 = sld [smem:[#allocation0]]
  $region38: #{tpu_custom_call.1} parent=0
    _
  %s10 = ssub.s32 1, %s8
  %s11 = scalar_select 0, %s10, %s8
  // Predicated region
  $region2: #{tpu_custom_call.1} parent=0 // pred_check
    _
  $region3: #{tpu_custom_call.1} parent=0 // pred_check_branch
    %13 = sbr.rel (0) target = $region5
  $region4: #{tpu_custom_call.1} parent=0 // pred_region
    _
  $region5: #{tpu_custom_call.1} parent=0 // pred_fallthru
    _
  // Predicated region
  $region6: #{tpu_custom_call.1} parent=0 // pred_check
    _
  $region7: #{tpu_custom_call.1} parent=0 // pred_check_branch
    %15 = sbr.rel (0) target = $region9
  $region8: #{tpu_custom_call.1} parent=0 // pred_region
    _
  $region9: #{tpu_custom_call.1} parent=0 // pred_fallthru
    _
  // Predicated region
  $region10: #{tpu_custom_call.1} parent=0 // pred_check
    _
  $region11: #{tpu_custom_call.1} parent=0 // pred_check_branch
    %17 = sbr.rel (0) target = $region13
  $region12: #{tpu_custom_call.1} parent=0 // pred_region
    _
  $region13: #{tpu_custom_call.1} parent=0 // pred_fallthru
    _
  // Predicated region
  $region14: #{tpu_custom_call.1} parent=0 // pred_check
    _
  $region15: #{tpu_custom_call.1} parent=0 // pred_check_branch
    %19 = sbr.rel (0) target = $region17
  $region16: #{tpu_custom_call.1} parent=0 // pred_region
    _
  $region17: #{tpu_custom_call.1} parent=0 // pred_fallthru
    _
  // Predicated region
  $region18: #{tpu_custom_call.1} parent=0 // pred_check
    _
  $region19: #{tpu_custom_call.1} parent=0 // pred_check_branch
    %21 = sbr.rel (0) target = $region21
  $region20: #{tpu_custom_call.1} parent=0 // pred_region
    _
  $region21: #{tpu_custom_call.1} parent=0 // pred_fallthru
    _
  // Predicated region
  $region22: #{tpu_custom_call.1} parent=0 // pred_check
    _
  $region23: #{tpu_custom_call.1} parent=0 // pred_check_branch
    %23 = sbr.rel (0) target = $region25
  $region24: #{tpu_custom_call.1} parent=0 // pred_region
    _
  $region25: #{tpu_custom_call.1} parent=0 // pred_fallthru
    _
  // Predicated region
  $region26: #{tpu_custom_call.1} parent=0 // pred_check
    _
  $region27: #{tpu_custom_call.1} parent=0 // pred_check_branch
    %25 = sbr.rel (0) target = $region29
  $region28: #{tpu_custom_call.1} parent=0 // pred_region
    _
  $region29: #{tpu_custom_call.1} parent=0 // pred_fallthru
    _
  %v26 = vld [vmem:[%s0] sm:$0xff]
  %v27 = vld [vmem:[%s0 + $0x8] sm:$0xff]
  %v28 = vld [vmem:[%s0 + $0x10] sm:$0xff]
  %v29 = vld [vmem:[%s0 + $0x18] sm:$0xff]
  %v30 = vld [vmem:[%s0 + $0x20] sm:$0xff]
  %v31 = vld [vmem:[%s0 + $0x28] sm:$0xff]
  %v32 = vld [vmem:[%s0 + $0x30] sm:$0xff]
  %v33 = vld [vmem:[%s0 + $0x38] sm:$0xff]
  %v34 = vld [vmem:[%s1] sm:$0xff]
  %v35 = vld [vmem:[%s1 + $0x8] sm:$0xff]
  %v36 = vld [vmem:[%s1 + $0x10] sm:$0xff]
  %v37 = vld [vmem:[%s1 + $0x18] sm:$0xff]
  %v38 = vld [vmem:[%s2] sm:$0x1]
  %v40 = vlaneseq
  %v41 = vshrl.u32 %v40, 7
  %v42 = vsub.s32 0, %v41
  %v43 = vrot.slane %v38, %v42
  %vm45 = vcmask 261120
  %v47 = vsel %vm45, %v26, 0
  %v50 = vsel %vm45, %v27, 0
  %v53 = vsel %vm45, %v28, 0
  %v56 = vsel %vm45, %v29, 0
  %v59 = vsel %vm45, %v30, 0
  %v62 = vsel %vm45, %v31, 0
  %v65 = vsel %vm45, %v32, 0
  %v68 = vsel %vm45, %v33, 0
  %70 = vmatprep.subr.mxu0 0.0
  %71 = vmatpush1.msra.mxu0 %v34
  %72 = vmatprep.subr.mxu0 0.0
  %73 = vmatpush1.msra.mxu0 %v35
  %74 = vmatprep.subr.mxu0 0.0
  %75 = vmatpush1.msra.mxu0 %v36
  %76 = vmatprep.subr.mxu0 0.0
  %77 = vmatpush1.msra.mxu0 %v37
  %78 = vmatprep.subr.mxu0 0.0
  %79 = vmatpush1.msra.mxu0 0.0
  %80 = vmatprep.subr.mxu0 0.0
  %81 = vmatpush1.msra.mxu0 0.0
  %82 = vmatprep.subr.mxu0 0.0
  %83 = vmatpush1.msra.mxu0 0.0
  %84 = vmatprep.subr.mxu0 0.0
  %85 = vmatpush1.msra.mxu0 0.0
  %86 = vmatprep.subr.mxu0 0.0
  %87 = vmatpush1.msra.mxu0 0.0
  %88 = vmatprep.subr.mxu0 0.0
  %89 = vmatpush1.msra.mxu0 0.0
  %90 = vmatprep.subr.mxu0 0.0
  %91 = vmatpush1.msra.mxu0 0.0
  %92 = vmatprep.subr.mxu0 0.0
  %93 = vmatpush1.msra.mxu0 0.0
  %94 = vmatprep.subr.mxu0 0.0
  %95 = vmatpush1.msra.mxu0 0.0
  %96 = vmatprep.subr.mxu0 0.0
  %97 = vmatpush1.msra.mxu0 0.0
  %98 = vmatprep.subr.mxu0 0.0
  %99 = vmatpush1.msra.mxu0 0.0
  %100 = vmatprep.subr.mxu0 0.0
  %101 = vmatpush1.msra.mxu0 0.0
  %102 = vmatprep.subr.mxu0 0.0
  %103 = vmatpush1.msra.mxu0 0.0
  %104 = vmatprep.subr.mxu0 0.0
  %105 = vmatpush1.msra.mxu0 0.0
  %106 = vmatprep.subr.mxu0 0.0
  %107 = vmatpush1.msra.mxu0 0.0
  %108 = vmatprep.subr.mxu0 0.0
  %109 = vmatpush1.msra.mxu0 0.0
  %110 = vmatprep.subr.mxu0 0.0
  %111 = vmatpush1.msra.mxu0 0.0
  %112 = vmatprep.subr.mxu0 0.0
  %113 = vmatpush1.msra.mxu0 0.0
  %114 = vmatprep.subr.mxu0 0.0
  %115 = vmatpush1.msra.mxu0 0.0
  %116 = vmatprep.subr.mxu0 0.0
  %117 = vmatpush1.msra.mxu0 0.0
  %118 = vmatprep.subr.mxu0 0.0
  %119 = vmatpush1.msra.mxu0 0.0
  %120 = vmatprep.subr.mxu0 0.0
  %121 = vmatpush1.msra.mxu0 0.0
  %122 = vmatprep.subr.mxu0 0.0
  %123 = vmatpush1.msra.mxu0 0.0
  %124 = vmatprep.subr.mxu0 0.0
  %125 = vmatpush1.msra.mxu0 0.0
  %126 = vmatprep.subr.mxu0 0.0
  %127 = vmatpush1.msra.mxu0 0.0
  %128 = vmatprep.subr.mxu0 0.0
  %129 = vmatpush1.msra.mxu0 0.0
  %130 = vmatprep.subr.mxu0 0.0
  %131 = vmatpush1.msra.mxu0 0.0
  %132 = vmatprep.subr.mxu0 0.0
  %133 = vmatpush1.msra.mxu0 0.0
  %134 = vmatprep.mubr.f32.mxu0 0.0
  %135 = vmatmul.mubr.f32.gmra.mrb[0].mxu0 %v47
  %v136 = vpop.f32.mrb[0].mxu0
  %v137 = vadd.f32 %v43, %v136
  %v138 = vpop.f32.mrb[0].mxu0
  %139 = vmatprep.mubr.f32.mxu0 0.0
  %140 = vmatmul.mubr.f32.gmra.mrb[0].mxu0 %v50
  %v141 = vpop.f32.mrb[0].mxu0
  %v142 = vadd.f32 %v43, %v141
  %v143 = vpop.f32.mrb[0].mxu0
  %144 = vmatprep.mubr.f32.mxu0 0.0
  %145 = vmatmul.mubr.f32.gmra.mrb[0].mxu0 %v53
  %v146 = vpop.f32.mrb[0].mxu0
  %v147 = vadd.f32 %v43, %v146
  %v148 = vpop.f32.mrb[0].mxu0
  %149 = vmatprep.mubr.f32.mxu0 0.0
  %150 = vmatmul.mubr.f32.gmra.mrb[0].mxu0 %v56
  %v151 = vpop.f32.mrb[0].mxu0
  %v152 = vadd.f32 %v43, %v151
  %v153 = vpop.f32.mrb[0].mxu0
  %154 = vmatprep.mubr.f32.mxu0 0.0
  %155 = vmatmul.mubr.f32.gmra.mrb[0].mxu0 %v59
  %v156 = vpop.f32.mrb[0].mxu0
  %v157 = vadd.f32 %v43, %v156
  %v158 = vpop.f32.mrb[0].mxu0
  %159 = vmatprep.mubr.f32.mxu0 0.0
  %160 = vmatmul.mubr.f32.gmra.mrb[0].mxu0 %v62
  %v161 = vpop.f32.mrb[0].mxu0
  %v162 = vadd.f32 %v43, %v161
  %v163 = vpop.f32.mrb[0].mxu0
  %164 = vmatprep.mubr.f32.mxu0 0.0
  %165 = vmatmul.mubr.f32.gmra.mrb[0].mxu0 %v65
  %v166 = vpop.f32.mrb[0].mxu0
  %v167 = vadd.f32 %v43, %v166
  %v168 = vpop.f32.mrb[0].mxu0
  %169 = vmatprep.mubr.f32.mxu0 0.0
  %170 = vmatmul.mubr.f32.gmra.mrb[0].mxu0 %v68
  %v171 = vpop.f32.mrb[0].mxu0
  %v172 = vadd.f32 %v43, %v171
  %v173 = vpop.f32.mrb[0].mxu0
  %174 = vdwg.mxu0
  %vm175 = vcmask 523264
  %v176 = vsel %vm175, %v137, 0.0
  %177 = vadd.xlane.f32.xlu0 %v176
  %v178 = vpop.xlane.xlu0 %177
  %v179 = vsel %vm175, %v142, 0.0
  %180 = vadd.xlane.f32.xlu0 %v179
  %v181 = vpop.xlane.xlu0 %180
  %v182 = vsel %vm175, %v147, 0.0
  %183 = vadd.xlane.f32.xlu0 %v182
  %v184 = vpop.xlane.xlu0 %183
  %v185 = vsel %vm175, %v152, 0.0
  %186 = vadd.xlane.f32.xlu0 %v185
  %v187 = vpop.xlane.xlu0 %186
  %v188 = vsel %vm175, %v157, 0.0
  %189 = vadd.xlane.f32.xlu0 %v188
  %v190 = vpop.xlane.xlu0 %189
  %v191 = vsel %vm175, %v162, 0.0
  %192 = vadd.xlane.f32.xlu0 %v191
  %v193 = vpop.xlane.xlu0 %192
  %v194 = vsel %vm175, %v167, 0.0
  %195 = vadd.xlane.f32.xlu0 %v194
  %v196 = vpop.xlane.xlu0 %195
  %v197 = vsel %vm175, %v172, 0.0
  %198 = vadd.xlane.f32.xlu0 %v197
  %v199 = vpop.xlane.xlu0 %198
  %v200 = vmul.f32 %v178, 0.015625
  %v201 = vmul.f32 %v181, 0.015625
  %v202 = vmul.f32 %v184, 0.015625
  %v203 = vmul.f32 %v187, 0.015625
  %v204 = vmul.f32 %v190, 0.015625
  %v205 = vmul.f32 %v193, 0.015625
  %v206 = vmul.f32 %v196, 0.015625
  %v207 = vmul.f32 %v199, 0.015625
  %v208 = vsub.f32 %v137, %v200
  %v209 = vsub.f32 %v142, %v201
  %v210 = vsub.f32 %v147, %v202
  %v211 = vsub.f32 %v152, %v203
  %v212 = vsub.f32 %v157, %v204
  %v213 = vsub.f32 %v162, %v205
  %v214 = vsub.f32 %v167, %v206
  %v215 = vsub.f32 %v172, %v207
  %v216 = vmul.f32 %v208, %v208
  %v217 = vmul.f32 %v209, %v209
  %v218 = vmul.f32 %v210, %v210
  %v219 = vmul.f32 %v211, %v211
  %v220 = vmul.f32 %v212, %v212
  %v221 = vmul.f32 %v213, %v213
  %v222 = vmul.f32 %v214, %v214
  %v223 = vmul.f32 %v215, %v215
  %v224 = vsel %vm175, %v216, 0.0
  %225 = vadd.xlane.f32.xlu0 %v224
  %v226 = vpop.xlane.xlu0 %225
  %v227 = vsel %vm175, %v217, 0.0
  %228 = vadd.xlane.f32.xlu0 %v227
  %v229 = vpop.xlane.xlu0 %228
  %v230 = vsel %vm175, %v218, 0.0
  %231 = vadd.xlane.f32.xlu0 %v230
  %v232 = vpop.xlane.xlu0 %231
  %v233 = vsel %vm175, %v219, 0.0
  %234 = vadd.xlane.f32.xlu0 %v233
  %v235 = vpop.xlane.xlu0 %234
  %v236 = vsel %vm175, %v220, 0.0
  %237 = vadd.xlane.f32.xlu0 %v236
  %v238 = vpop.xlane.xlu0 %237
  %v239 = vsel %vm175, %v221, 0.0
  %240 = vadd.xlane.f32.xlu0 %v239
  %v241 = vpop.xlane.xlu0 %240
  %v242 = vsel %vm175, %v222, 0.0
  %243 = vadd.xlane.f32.xlu0 %v242
  %v244 = vpop.xlane.xlu0 %243
  %v245 = vsel %vm175, %v223, 0.0
  %246 = vadd.xlane.f32.xlu0 %v245
  %v247 = vpop.xlane.xlu0 %246
  %v248 = vmul.f32 %v226, 0.015625
  %v249 = vmul.f32 %v229, 0.015625
  %v250 = vmul.f32 %v232, 0.015625
  %v251 = vmul.f32 %v235, 0.015625
  %v252 = vmul.f32 %v238, 0.015625
  %v253 = vmul.f32 %v241, 0.015625
  %v254 = vmul.f32 %v244, 0.015625
  %v255 = vmul.f32 %v247, 0.015625
  %v256 = vadd.f32 %v248, 1e-05
  %v257 = vadd.f32 %v249, 1e-05
  %v258 = vadd.f32 %v250, 1e-05
  %v259 = vadd.f32 %v251, 1e-05
  %v260 = vadd.f32 %v252, 1e-05
  %v261 = vadd.f32 %v253, 1e-05
  %v262 = vadd.f32 %v254, 1e-05
  %v263 = vadd.f32 %v255, 1e-05
  %v264 = vrsqrt.pop %v256
  %v265 = vrsqrt.pop %v257
  %v266 = vrsqrt.pop %v258
  %v267 = vrsqrt.pop %v259
  %v268 = vrsqrt.pop %v260
  %v269 = vrsqrt.pop %v261
  %v270 = vrsqrt.pop %v262
  %v271 = vrsqrt.pop %v263
  %v272 = vmul.f32 %v208, %v264
  %v273 = vmul.f32 %v209, %v265
  %v274 = vmul.f32 %v210, %v266
  %v275 = vmul.f32 %v211, %v267
  %v276 = vmul.f32 %v212, %v268
  %v277 = vmul.f32 %v213, %v269
  %v278 = vmul.f32 %v214, %v270
  %v279 = vmul.f32 %v215, %v271
  %v280 = vmax.f32 %v272, 0.0
  %v281 = vmax.f32 %v273, 0.0
  %v282 = vmax.f32 %v274, 0.0
  %v283 = vmax.f32 %v275, 0.0
  %v284 = vmax.f32 %v276, 0.0
  %v285 = vmax.f32 %v277, 0.0
  %v286 = vmax.f32 %v278, 0.0
  %v287 = vmax.f32 %v279, 0.0
  %v288 = vld [vmem:[%s3] sm:$0xff]
  %v289 = vld [vmem:[%s3 + $0x8] sm:$0xff]
  %v290 = vld [vmem:[%s3 + $0x10] sm:$0xff]
  %v291 = vld [vmem:[%s3 + $0x18] sm:$0xff]
  %v292 = vld [vmem:[%s3 + $0x20] sm:$0xff]
  %v293 = vld [vmem:[%s3 + $0x28] sm:$0xff]
  %v294 = vld [vmem:[%s3 + $0x30] sm:$0xff]
  %v295 = vld [vmem:[%s3 + $0x38] sm:$0xff]
  %v296 = vld [vmem:[%s4] sm:$0x1]
  %v298 = vlaneseq
  %v299 = vshrl.u32 %v298, 7
  %v300 = vsub.s32 0, %v299
  %v301 = vrot.slane %v296, %v300
  %v304 = vsel %vm175, %v280, 0
  %v307 = vsel %vm175, %v281, 0
  %v310 = vsel %vm175, %v282, 0
  %v313 = vsel %vm175, %v283, 0
  %v316 = vsel %vm175, %v284, 0
  %v319 = vsel %vm175, %v285, 0
  %v322 = vsel %vm175, %v286, 0
  %v325 = vsel %vm175, %v287, 0
  %327 = vmatprep.subr.mxu0 0.0
  %328 = vmatpush1.msra.mxu0 %v288
  %329 = vmatprep.subr.mxu0 0.0
  %330 = vmatpush1.msra.mxu0 %v289
  %331 = vmatprep.subr.mxu0 0.0
  %332 = vmatpush1.msra.mxu0 %v290
  %333 = vmatprep.subr.mxu0 0.0
  %334 = vmatpush1.msra.mxu0 %v291
  %335 = vmatprep.subr.mxu0 0.0
  %336 = vmatpush1.msra.mxu0 %v292
  %337 = vmatprep.subr.mxu0 0.0
  %338 = vmatpush1.msra.mxu0 %v293
  %339 = vmatprep.subr.mxu0 0.0
  %340 = vmatpush1.msra.mxu0 %v294
  %341 = vmatprep.subr.mxu0 0.0
  %342 = vmatpush1.msra.mxu0 %v295
  %343 = vmatprep.subr.mxu0 0.0
  %344 = vmatpush1.msra.mxu0 0.0
  %345 = vmatprep.subr.mxu0 0.0
  %346 = vmatpush1.msra.mxu0 0.0
  %347 = vmatprep.subr.mxu0 0.0
  %348 = vmatpush1.msra.mxu0 0.0
  %349 = vmatprep.subr.mxu0 0.0
  %350 = vmatpush1.msra.mxu0 0.0
  %351 = vmatprep.subr.mxu0 0.0
  %352 = vmatpush1.msra.mxu0 0.0
  %353 = vmatprep.subr.mxu0 0.0
  %354 = vmatpush1.msra.mxu0 0.0
  %355 = vmatprep.subr.mxu0 0.0
  %356 = vmatpush1.msra.mxu0 0.0
  %357 = vmatprep.subr.mxu0 0.0
  %358 = vmatpush1.msra.mxu0 0.0
  %359 = vmatprep.subr.mxu0 0.0
  %360 = vmatpush1.msra.mxu0 0.0
  %361 = vmatprep.subr.mxu0 0.0
  %362 = vmatpush1.msra.mxu0 0.0
  %363 = vmatprep.subr.mxu0 0.0
  %364 = vmatpush1.msra.mxu0 0.0
  %365 = vmatprep.subr.mxu0 0.0
  %366 = vmatpush1.msra.mxu0 0.0
  %367 = vmatprep.subr.mxu0 0.0
  %368 = vmatpush1.msra.mxu0 0.0
  %369 = vmatprep.subr.mxu0 0.0
  %370 = vmatpush1.msra.mxu0 0.0
  %371 = vmatprep.subr.mxu0 0.0
  %372 = vmatpush1.msra.mxu0 0.0
  %373 = vmatprep.subr.mxu0 0.0
  %374 = vmatpush1.msra.mxu0 0.0
  %375 = vmatprep.subr.mxu0 0.0
  %376 = vmatpush1.msra.mxu0 0.0
  %377 = vmatprep.subr.mxu0 0.0
  %378 = vmatpush1.msra.mxu0 0.0
  %379 = vmatprep.subr.mxu0 0.0
  %380 = vmatpush1.msra.mxu0 0.0
  %381 = vmatprep.subr.mxu0 0.0
  %382 = vmatpush1.msra.mxu0 0.0
  %383 = vmatprep.subr.mxu0 0.0
  %384 = vmatpush1.msra.mxu0 0.0
  %385 = vmatprep.subr.mxu0 0.0
  %386 = vmatpush1.msra.mxu0 0.0
  %387 = vmatprep.subr.mxu0 0.0
  %388 = vmatpush1.msra.mxu0 0.0
  %389 = vmatprep.subr.mxu0 0.0
  %390 = vmatpush1.msra.mxu0 0.0
  %391 = vmatprep.mubr.f32.mxu0 0.0
  %392 = vmatmul.mubr.f32.gmra.mrb[0].mxu0 %v304
  %v393 = vpop.f32.mrb[0].mxu0
  %v394 = vadd.f32 %v301, %v393
  %v395 = vpop.f32.mrb[0].mxu0
  %396 = vmatprep.mubr.f32.mxu0 0.0
  %397 = vmatmul.mubr.f32.gmra.mrb[0].mxu0 %v307
  %v398 = vpop.f32.mrb[0].mxu0
  %v399 = vadd.f32 %v301, %v398
  %v400 = vpop.f32.mrb[0].mxu0
  %401 = vmatprep.mubr.f32.mxu0 0.0
  %402 = vmatmul.mubr.f32.gmra.mrb[0].mxu0 %v310
  %v403 = vpop.f32.mrb[0].mxu0
  %v404 = vadd.f32 %v301, %v403
  %v405 = vpop.f32.mrb[0].mxu0
  %406 = vmatprep.mubr.f32.mxu0 0.0
  %407 = vmatmul.mubr.f32.gmra.mrb[0].mxu0 %v313
  %v408 = vpop.f32.mrb[0].mxu0
  %v409 = vadd.f32 %v301, %v408
  %v410 = vpop.f32.mrb[0].mxu0
  %411 = vmatprep.mubr.f32.mxu0 0.0
  %412 = vmatmul.mubr.f32.gmra.mrb[0].mxu0 %v316
  %v413 = vpop.f32.mrb[0].mxu0
  %v414 = vadd.f32 %v301, %v413
  %v415 = vpop.f32.mrb[0].mxu0
  %416 = vmatprep.mubr.f32.mxu0 0.0
  %417 = vmatmul.mubr.f32.gmra.mrb[0].mxu0 %v319
  %v418 = vpop.f32.mrb[0].mxu0
  %v419 = vadd.f32 %v301, %v418
  %v420 = vpop.f32.mrb[0].mxu0
  %421 = vmatprep.mubr.f32.mxu0 0.0
  %422 = vmatmul.mubr.f32.gmra.mrb[0].mxu0 %v322
  %v423 = vpop.f32.mrb[0].mxu0
  %v424 = vadd.f32 %v301, %v423
  %v425 = vpop.f32.mrb[0].mxu0
  %426 = vmatprep.mubr.f32.mxu0 0.0
  %427 = vmatmul.mubr.f32.gmra.mrb[0].mxu0 %v325
  %v428 = vpop.f32.mrb[0].mxu0
  %v429 = vadd.f32 %v301, %v428
  %v430 = vpop.f32.mrb[0].mxu0
  %431 = vdwg.mxu0
  %v432 = vsel %vm45, %v394, 0.0
  %433 = vadd.xlane.f32.xlu0 %v432
  %v434 = vpop.xlane.xlu0 %433
  %v435 = vsel %vm45, %v399, 0.0
  %436 = vadd.xlane.f32.xlu0 %v435
  %v437 = vpop.xlane.xlu0 %436
  %v438 = vsel %vm45, %v404, 0.0
  %439 = vadd.xlane.f32.xlu0 %v438
  %v440 = vpop.xlane.xlu0 %439
  %v441 = vsel %vm45, %v409, 0.0
  %442 = vadd.xlane.f32.xlu0 %v441
  %v443 = vpop.xlane.xlu0 %442
  %v444 = vsel %vm45, %v414, 0.0
  %445 = vadd.xlane.f32.xlu0 %v444
  %v446 = vpop.xlane.xlu0 %445
  %v447 = vsel %vm45, %v419, 0.0
  %448 = vadd.xlane.f32.xlu0 %v447
  %v449 = vpop.xlane.xlu0 %448
  %v450 = vsel %vm45, %v424, 0.0
  %451 = vadd.xlane.f32.xlu0 %v450
  %v452 = vpop.xlane.xlu0 %451
  %v453 = vsel %vm45, %v429, 0.0
  %454 = vadd.xlane.f32.xlu0 %v453
  %v455 = vpop.xlane.xlu0 %454
  %v456 = vmul.f32 %v434, 0.03125
  %v457 = vmul.f32 %v437, 0.03125
  %v458 = vmul.f32 %v440, 0.03125
  %v459 = vmul.f32 %v443, 0.03125
  %v460 = vmul.f32 %v446, 0.03125
  %v461 = vmul.f32 %v449, 0.03125
  %v462 = vmul.f32 %v452, 0.03125
  %v463 = vmul.f32 %v455, 0.03125
  %v464 = vsub.f32 %v394, %v456
  %v465 = vsub.f32 %v399, %v457
  %v466 = vsub.f32 %v404, %v458
  %v467 = vsub.f32 %v409, %v459
  %v468 = vsub.f32 %v414, %v460
  %v469 = vsub.f32 %v419, %v461
  %v470 = vsub.f32 %v424, %v462
  %v471 = vsub.f32 %v429, %v463
  %v472 = vmul.f32 %v464, %v464
  %v473 = vmul.f32 %v465, %v465
  %v474 = vmul.f32 %v466, %v466
  %v475 = vmul.f32 %v467, %v467
  %v476 = vmul.f32 %v468, %v468
  %v477 = vmul.f32 %v469, %v469
  %v478 = vmul.f32 %v470, %v470
  %v479 = vmul.f32 %v471, %v471
  %v480 = vsel %vm45, %v472, 0.0
  %481 = vadd.xlane.f32.xlu0 %v480
  %v482 = vpop.xlane.xlu0 %481
  %v483 = vsel %vm45, %v473, 0.0
  %484 = vadd.xlane.f32.xlu0 %v483
  %v485 = vpop.xlane.xlu0 %484
  %v486 = vsel %vm45, %v474, 0.0
  %487 = vadd.xlane.f32.xlu0 %v486
  %v488 = vpop.xlane.xlu0 %487
  %v489 = vsel %vm45, %v475, 0.0
  %490 = vadd.xlane.f32.xlu0 %v489
  %v491 = vpop.xlane.xlu0 %490
  %v492 = vsel %vm45, %v476, 0.0
  %493 = vadd.xlane.f32.xlu0 %v492
  %v494 = vpop.xlane.xlu0 %493
  %v495 = vsel %vm45, %v477, 0.0
  %496 = vadd.xlane.f32.xlu0 %v495
  %v497 = vpop.xlane.xlu0 %496
  %v498 = vsel %vm45, %v478, 0.0
  %499 = vadd.xlane.f32.xlu0 %v498
  %v500 = vpop.xlane.xlu0 %499
  %v501 = vsel %vm45, %v479, 0.0
  %502 = vadd.xlane.f32.xlu0 %v501
  %v503 = vpop.xlane.xlu0 %502
  %v504 = vmul.f32 %v482, 0.03125
  %v505 = vmul.f32 %v485, 0.03125
  %v506 = vmul.f32 %v488, 0.03125
  %v507 = vmul.f32 %v491, 0.03125
  %v508 = vmul.f32 %v494, 0.03125
  %v509 = vmul.f32 %v497, 0.03125
  %v510 = vmul.f32 %v500, 0.03125
  %v511 = vmul.f32 %v503, 0.03125
  %v512 = vadd.f32 %v504, 1e-05
  %v513 = vadd.f32 %v505, 1e-05
  %v514 = vadd.f32 %v506, 1e-05
  %v515 = vadd.f32 %v507, 1e-05
  %v516 = vadd.f32 %v508, 1e-05
  %v517 = vadd.f32 %v509, 1e-05
  %v518 = vadd.f32 %v510, 1e-05
  %v519 = vadd.f32 %v511, 1e-05
  %v520 = vrsqrt.pop %v512
  %v521 = vrsqrt.pop %v513
  %v522 = vrsqrt.pop %v514
  %v523 = vrsqrt.pop %v515
  %v524 = vrsqrt.pop %v516
  %v525 = vrsqrt.pop %v517
  %v526 = vrsqrt.pop %v518
  %v527 = vrsqrt.pop %v519
  %v528 = vmul.f32 %v464, %v520
  %v529 = vmul.f32 %v465, %v521
  %v530 = vmul.f32 %v466, %v522
  %v531 = vmul.f32 %v467, %v523
  %v532 = vmul.f32 %v468, %v524
  %v533 = vmul.f32 %v469, %v525
  %v534 = vmul.f32 %v470, %v526
  %v535 = vmul.f32 %v471, %v527
  %v536 = vmax.f32 %v528, 0.0
  %v537 = vmax.f32 %v529, 0.0
  %v538 = vmax.f32 %v530, 0.0
  %v539 = vmax.f32 %v531, 0.0
  %v540 = vmax.f32 %v532, 0.0
  %v541 = vmax.f32 %v533, 0.0
  %v542 = vmax.f32 %v534, 0.0
  %v543 = vmax.f32 %v535, 0.0
  %v544 = vld [vmem:[%s5] sm:$0xff]
  %v545 = vld [vmem:[%s5 + $0x8] sm:$0xff]
  %v546 = vld [vmem:[%s5 + $0x10] sm:$0xff]
  %v547 = vld [vmem:[%s5 + $0x18] sm:$0xff]
  %v548 = vld [vmem:[%s6] sm:$0x1]
  %v550 = vlaneseq
  %v551 = vshrl.u32 %v550, 7
  %v552 = vsub.s32 0, %v551
  %v553 = vrot.slane %v548, %v552
  %v556 = vsel %vm45, %v536, 0
  %v559 = vsel %vm45, %v537, 0
  %v562 = vsel %vm45, %v538, 0
  %v565 = vsel %vm45, %v539, 0
  %v568 = vsel %vm45, %v540, 0
  %v571 = vsel %vm45, %v541, 0
  %v574 = vsel %vm45, %v542, 0
  %v577 = vsel %vm45, %v543, 0
  %579 = vmatprep.subr.mxu0 0.0
  %580 = vmatpush1.msra.mxu0 %v544
  %581 = vmatprep.subr.mxu0 0.0
  %582 = vmatpush1.msra.mxu0 %v545
  %583 = vmatprep.subr.mxu0 0.0
  %584 = vmatpush1.msra.mxu0 %v546
  %585 = vmatprep.subr.mxu0 0.0
  %586 = vmatpush1.msra.mxu0 %v547
  %587 = vmatprep.subr.mxu0 0.0
  %588 = vmatpush1.msra.mxu0 0.0
  %589 = vmatprep.subr.mxu0 0.0
  %590 = vmatpush1.msra.mxu0 0.0
  %591 = vmatprep.subr.mxu0 0.0
  %592 = vmatpush1.msra.mxu0 0.0
  %593 = vmatprep.subr.mxu0 0.0
  %594 = vmatpush1.msra.mxu0 0.0
  %595 = vmatprep.subr.mxu0 0.0
  %596 = vmatpush1.msra.mxu0 0.0
  %597 = vmatprep.subr.mxu0 0.0
  %598 = vmatpush1.msra.mxu0 0.0
  %599 = vmatprep.subr.mxu0 0.0
  %600 = vmatpush1.msra.mxu0 0.0
  %601 = vmatprep.subr.mxu0 0.0
  %602 = vmatpush1.msra.mxu0 0.0
  %603 = vmatprep.subr.mxu0 0.0
  %604 = vmatpush1.msra.mxu0 0.0
  %605 = vmatprep.subr.mxu0 0.0
  %606 = vmatpush1.msra.mxu0 0.0
  %607 = vmatprep.subr.mxu0 0.0
  %608 = vmatpush1.msra.mxu0 0.0
  %609 = vmatprep.subr.mxu0 0.0
  %610 = vmatpush1.msra.mxu0 0.0
  %611 = vmatprep.subr.mxu0 0.0
  %612 = vmatpush1.msra.mxu0 0.0
  %613 = vmatprep.subr.mxu0 0.0
  %614 = vmatpush1.msra.mxu0 0.0
  %615 = vmatprep.subr.mxu0 0.0
  %616 = vmatpush1.msra.mxu0 0.0
  %617 = vmatprep.subr.mxu0 0.0
  %618 = vmatpush1.msra.mxu0 0.0
  %619 = vmatprep.subr.mxu0 0.0
  %620 = vmatpush1.msra.mxu0 0.0
  %621 = vmatprep.subr.mxu0 0.0
  %622 = vmatpush1.msra.mxu0 0.0
  %623 = vmatprep.subr.mxu0 0.0
  %624 = vmatpush1.msra.mxu0 0.0
  %625 = vmatprep.subr.mxu0 0.0
  %626 = vmatpush1.msra.mxu0 0.0
  %627 = vmatprep.subr.mxu0 0.0
  %628 = vmatpush1.msra.mxu0 0.0
  %629 = vmatprep.subr.mxu0 0.0
  %630 = vmatpush1.msra.mxu0 0.0
  %631 = vmatprep.subr.mxu0 0.0
  %632 = vmatpush1.msra.mxu0 0.0
  %633 = vmatprep.subr.mxu0 0.0
  %634 = vmatpush1.msra.mxu0 0.0
  %635 = vmatprep.subr.mxu0 0.0
  %636 = vmatpush1.msra.mxu0 0.0
  %637 = vmatprep.subr.mxu0 0.0
  %638 = vmatpush1.msra.mxu0 0.0
  %639 = vmatprep.subr.mxu0 0.0
  %640 = vmatpush1.msra.mxu0 0.0
  %641 = vmatprep.subr.mxu0 0.0
  %642 = vmatpush1.msra.mxu0 0.0
  %643 = vmatprep.mubr.f32.mxu0 0.0
  %644 = vmatmul.mubr.f32.gmra.mrb[0].mxu0 %v556
  %v645 = vpop.f32.mrb[0].mxu0
  %v646 = vadd.f32 %v553, %v645
  %v647 = vpop.f32.mrb[0].mxu0
  %648 = vmatprep.mubr.f32.mxu0 0.0
  %649 = vmatmul.mubr.f32.gmra.mrb[0].mxu0 %v559
  %v650 = vpop.f32.mrb[0].mxu0
  %v651 = vadd.f32 %v553, %v650
  %v652 = vpop.f32.mrb[0].mxu0
  %653 = vmatprep.mubr.f32.mxu0 0.0
  %654 = vmatmul.mubr.f32.gmra.mrb[0].mxu0 %v562
  %v655 = vpop.f32.mrb[0].mxu0
  %v656 = vadd.f32 %v553, %v655
  %v657 = vpop.f32.mrb[0].mxu0
  %658 = vmatprep.mubr.f32.mxu0 0.0
  %659 = vmatmul.mubr.f32.gmra.mrb[0].mxu0 %v565
  %v660 = vpop.f32.mrb[0].mxu0
  %v661 = vadd.f32 %v553, %v660
  %v662 = vpop.f32.mrb[0].mxu0
  %663 = vmatprep.mubr.f32.mxu0 0.0
  %664 = vmatmul.mubr.f32.gmra.mrb[0].mxu0 %v568
  %v665 = vpop.f32.mrb[0].mxu0
  %v666 = vadd.f32 %v553, %v665
  %v667 = vpop.f32.mrb[0].mxu0
  %668 = vmatprep.mubr.f32.mxu0 0.0
  %669 = vmatmul.mubr.f32.gmra.mrb[0].mxu0 %v571
  %v670 = vpop.f32.mrb[0].mxu0
  %v671 = vadd.f32 %v553, %v670
  %v672 = vpop.f32.mrb[0].mxu0
  %673 = vmatprep.mubr.f32.mxu0 0.0
  %674 = vmatmul.mubr.f32.gmra.mrb[0].mxu0 %v574
  %v675 = vpop.f32.mrb[0].mxu0
  %v676 = vadd.f32 %v553, %v675
  %v677 = vpop.f32.mrb[0].mxu0
  %678 = vmatprep.mubr.f32.mxu0 0.0
  %679 = vmatmul.mubr.f32.gmra.mrb[0].mxu0 %v577
  %v680 = vpop.f32.mrb[0].mxu0
  %v681 = vadd.f32 %v553, %v680
  %v682 = vpop.f32.mrb[0].mxu0
  %683 = vdwg.mxu0
  %684 = vst.msk [vmem:[%s7] sm:$0xff] %vm45, %v646
  %685 = vst.msk [vmem:[%s7 + $0x8] sm:$0xff] %vm45, %v651
  %686 = vst.msk [vmem:[%s7 + $0x10] sm:$0xff] %vm45, %v656
  %687 = vst.msk [vmem:[%s7 + $0x18] sm:$0xff] %vm45, %v661
  %688 = vst.msk [vmem:[%s7 + $0x20] sm:$0xff] %vm45, %v666
  %689 = vst.msk [vmem:[%s7 + $0x28] sm:$0xff] %vm45, %v671
  %690 = vst.msk [vmem:[%s7 + $0x30] sm:$0xff] %vm45, %v676
  %691 = vst.msk [vmem:[%s7 + $0x38] sm:$0xff] %vm45, %v681
  // Predicated region
  $region30: #{tpu_custom_call.1} parent=0 // pred_check
    _
  $region31: #{tpu_custom_call.1} parent=0 // pred_check_branch
    %693 = sbr.rel (0) target = $region33
  $region32: #{tpu_custom_call.1} parent=0 // pred_region
    _
  $region33: #{tpu_custom_call.1} parent=0 // pred_fallthru
    _
  // Predicated region
  $region34: #{tpu_custom_call.1} parent=0 // pred_check
    _
  $region35: #{tpu_custom_call.1} parent=0 // pred_check_branch
    %695 = sbr.rel (0) target = $region37
  $region36: #{tpu_custom_call.1} parent=0 // pred_region
    _
  $region37: #{tpu_custom_call.1} parent=0 // pred_fallthru
    _

</llo_original>
